<compile_context>
chip_gen: v7x
topology: tpu7x:2x2x1
jax: 0.10.0
libtpu: 0.0.40
codegen_flags: <defaults>
</compile_context>

<pallas_src>
import functools

import jax
import jax.numpy as jnp
from jax import lax
from jax.experimental import pallas as pl
from jax.experimental.pallas import tpu as pltpu

_LANE = 128
_SUBLANE = 8


def _round_up(x, m):
    return ((x + m - 1) // m) * m


def _choose_batch_tile(B, batch_tile):
    """Pick the batch tile tb (lane dim of the (A, tb) output block).

    * B <= 128: one block whose dims equal the full array dims (always layout
      legal; single grid step).
    * Otherwise tb must be a multiple of 128 (lane dim of the output block and
      sublane dim of the (tb, S) x block).  Big tiles amortize per-grid-step
      overhead; capping at ~B/2 guarantees >=2 grid steps so both v7x
      TensorCores get work under dimension_semantics=("parallel",).
    """
    if B <= _LANE:
        return B
    batch_tile = max(_LANE, _round_up(batch_tile, _LANE))
    two_steps = _round_up(pl.cdiv(B, 2), _LANE)
    return min(batch_tile, two_steps)


def qnet_kernel(x_ref, w1t_ref, b1_ref, w2_ref, b2_ref, w3_ref, b3_ref, o_ref):
    """Fused 3-layer MLP for one batch tile.

    x_ref  : (tb, S)    batch-major input tile (batch on sublanes)
    w1t_ref: (S, F1)    fc1 weight transposed to (in, out)
    b1_ref : (1, F1)
    w2_ref : (F2, F1)   fc2 weight, PyTorch-native (out, in)
    b2_ref : (F2, 1)
    w3_ref : (A, F2)    fc3 weight, PyTorch-native (out, in)
    b3_ref : (A, 1)
    o_ref  : (A, tb)    feature-major Q-value tile (batch on lanes)
    """
    x = x_ref[...]

    # Layer 1 (batch-major, plain NN dot): (tb, S) @ (S, F1) -> (tb, F1).
    h1 = jnp.dot(x, w1t_ref[...], preferred_element_type=jnp.float32) + b1_ref[...]
    h1 = jnp.maximum(h1, 0.0)

    # Layer 2 flips to feature-major by contracting h1's feature axis with an
    # A.B^T dot (flash-attention NT dimension numbers):
    #   (F2, F1) . (tb, F1)^T -> (F2, tb)   — batch lands on the lane axis.
    h2 = lax.dot_general(w2_ref[...], h1, (((1,), (1,)), ((), ())),
                         preferred_element_type=jnp.float32) + b2_ref[...]
    h2 = jnp.maximum(h2, 0.0)

    # Layer 3 (feature-major): (A, F2) @ (F2, tb) -> (A, tb).
    q = jnp.dot(w3_ref[...], h2, preferred_element_type=jnp.float32) + b3_ref[...]
    o_ref[...] = q.astype(o_ref.dtype)


@functools.partial(jax.jit, static_argnames=("batch_tile",))
def ptqnet_forward_feature_major(x, params, batch_tile=2048):
    """x: (B, state_size) f32 -> Q-values feature-major (action_size, B).

    Use this form directly when the consumer (argmax / action gather / TD
    target) can take actions-on-rows: it avoids any transpose of the result.
    """
    w1, b1 = params["w1"], params["b1"]   # (F1, S), (F1,)
    w2, b2 = params["w2"], params["b2"]   # (F2, F1), (F2,)
    w3, b3 = params["w3"], params["b3"]   # (A, F2), (A,)

    B, S = x.shape
    F1 = w1.shape[0]
    F2 = w2.shape[0]
    A = w3.shape[0]

    # Tiny one-time parameter layout prep (a few KB; negligible next to x).
    w1t = w1.T                  # (S, F1) so layer 1 is a plain NN dot
    b1r = b1.reshape(1, F1)     # broadcast over batch rows (sublanes)
    b2c = b2.reshape(F2, 1)     # broadcast over batch columns (lanes)
    b3c = b3.reshape(A, 1)

    tb = _choose_batch_tile(B, batch_tile)
    grid = (pl.cdiv(B, tb),)

    # Weights/biases: full blocks with a constant index_map -> DMA'd once and
    # kept resident in VMEM across all batch tiles (no per-step re-DMA).
    def full(shape):
        return pl.BlockSpec(shape, lambda i: (0,) * len(shape))

    flops = 2 * B * (S * F1 + F1 * F2 + F2 * A)
    bytes_accessed = 4 * (
        B * S + B * A                       # input read + Q-value write (unpadded)
        + S * F1 + F1                       # layer 1 params
        + F1 * F2 + F2                      # layer 2 params
        + F2 * A + A                        # layer 3 params
    )

    out_fm = pl.pallas_call(
        qnet_kernel,
        out_shape=jax.ShapeDtypeStruct((A, B), jnp.float32),
        grid=grid,
        in_specs=[
            pl.BlockSpec((tb, S), lambda i: (i, 0)),     # x batch tile
            full((S, F1)), full((1, F1)),                # layer 1
            full((F2, F1)), full((F2, 1)),               # layer 2
            full((A, F2)), full((A, 1)),                 # layer 3
        ],
        out_specs=pl.BlockSpec((A, tb), lambda i: (0, i)),
        compiler_params=pltpu.CompilerParams(
            dimension_semantics=("parallel",),
            vmem_limit_bytes=32 * 1024 * 1024),
        cost_estimate=pl.CostEstimate(
            flops=flops, transcendentals=0, bytes_accessed=bytes_accessed),
    )(x, w1t, b1r, w2, b2c, w3, b3c)

    return out_fm


@functools.partial(jax.jit, static_argnames=("batch_tile",))
def ptqnet_forward(x, params, batch_tile=2048):
    """PyTorch-convention forward: x (B, state_size) -> Q-values (B, action_size)."""
    # The (A, B) -> (B, A) transpose is a tiny XLA pass (16 B/row read + write);
    # fuse the consumer on the feature-major result to eliminate it entirely.
    return ptqnet_forward_feature_major(x, params, batch_tile=batch_tile).T


def init_params(key, state_size, action_size, fc1_units=64, fc2_units=64):
    """PyTorch-native (out, in) weights, U(-1/sqrt(fan_in), 1/sqrt(fan_in)) like nn.Linear."""
    ks = jax.random.split(key, 6)

    def linear(kw, kb, fan_in, fan_out):
        bound = 1.0 / jnp.sqrt(jnp.float32(fan_in))
        w = jax.random.uniform(kw, (fan_out, fan_in), jnp.float32, -bound, bound)
        b = jax.random.uniform(kb, (fan_out,), jnp.float32, -bound, bound)
        return w, b

    w1, b1 = linear(ks[0], ks[1], state_size, fc1_units)
    w2, b2 = linear(ks[2], ks[3], fc1_units, fc2_units)
    w3, b3 = linear(ks[4], ks[5], fc2_units, action_size)
    return {"w1": w1, "b1": b1, "w2": w2, "b2": b2, "w3": w3, "b3": b3}


def reference_forward(x, params):
    """Pure-JAX reference with PyTorch nn.Linear semantics (y = x @ W^T + b)."""
    h1 = jnp.maximum(x @ params["w1"].T + params["b1"], 0.0)
    h2 = jnp.maximum(h1 @ params["w2"].T + params["b2"], 0.0)
    return h2 @ params["w3"].T + params["b3"]


if __name__ == "__main__":
    key = jax.random.PRNGKey(0)
    k_params, k_x1, k_x2 = jax.random.split(key, 3)

    state_size = 8
    action_size = 4

    params = init_params(k_params, state_size, action_size,
                         fc1_units=64, fc2_units=64)

    # Small batch: single grid step, block dims equal the full array dims.
    x_small = jax.random.normal(k_x1, (8, state_size), jnp.float32)
    out_small = jax.block_until_ready(ptqnet_forward(x_small, params))
    ref_small = reference_forward(x_small, params)
    assert out_small.shape == (8, action_size)
    assert jnp.allclose(out_small, ref_small, atol=1e-4, rtol=1e-4), "small-batch mismatch"

    # Larger ragged batch: multi-step grid (>=2 steps -> both v7x cores busy),
    # masked final partial block on both the x tile and the (A, tb) Q tile.
    x_big = jax.random.normal(k_x2, (1000, state_size), jnp.float32)
    out_big = jax.block_until_ready(ptqnet_forward(x_big, params))
    ref_big = reference_forward(x_big, params)
    assert out_big.shape == (1000, action_size)
    assert jnp.allclose(out_big, ref_big, atol=1e-4, rtol=1e-4), "large-batch mismatch"

    print("KERNEL_OK")
</pallas_src>

<mosaic_0001>
module attributes {stable_mosaic.version = 11 : i64} {
  func.func @qnet_kernel(%arg0: i32, %arg1: memref<8x8xf32, #tpu.memory_space<vmem>>, %arg2: memref<8x64xf32, #tpu.memory_space<vmem>>, %arg3: memref<1x64xf32, #tpu.memory_space<vmem>>, %arg4: memref<64x64xf32, #tpu.memory_space<vmem>>, %arg5: memref<64x1xf32, #tpu.memory_space<vmem>>, %arg6: memref<4x64xf32, #tpu.memory_space<vmem>>, %arg7: memref<4x1xf32, #tpu.memory_space<vmem>>, %arg8: memref<4x8xf32, #tpu.memory_space<vmem>>) attributes {dimension_semantics = [#tpu.dimension_semantics<parallel>], iteration_bounds = array<i64: 1>, scalar_prefetch = 0 : i64, scratch_operands = 0 : i64, tpu.core_type = #tpu.core_type<tc>, window_params = [{transform_indices = @transform_0, window_bounds = array<i64: 8, 8>}, {pipeline_mode = #tpu.pipeline_mode<synchronous>, transform_indices = @transform_1, window_bounds = array<i64: 8, 64>}, {pipeline_mode = #tpu.pipeline_mode<synchronous>, transform_indices = @transform_2, window_bounds = array<i64: 1, 64>}, {pipeline_mode = #tpu.pipeline_mode<synchronous>, transform_indices = @transform_3, window_bounds = array<i64: 64, 64>}, {pipeline_mode = #tpu.pipeline_mode<synchronous>, transform_indices = @transform_4, window_bounds = array<i64: 64, 1>}, {pipeline_mode = #tpu.pipeline_mode<synchronous>, transform_indices = @transform_5, window_bounds = array<i64: 4, 64>}, {pipeline_mode = #tpu.pipeline_mode<synchronous>, transform_indices = @transform_6, window_bounds = array<i64: 4, 1>}, {transform_indices = @transform_7, window_bounds = array<i64: 4, 8>}]} {
    %c0 = arith.constant 0 : index
    %c0_0 = arith.constant 0 : index
    %0 = vector.load %arg1[%c0, %c0_0] : memref<8x8xf32, #tpu.memory_space<vmem>>, vector<8x8xf32>
    %c0_1 = arith.constant 0 : index
    %c0_2 = arith.constant 0 : index
    %1 = vector.load %arg2[%c0_1, %c0_2] : memref<8x64xf32, #tpu.memory_space<vmem>>, vector<8x64xf32>
    %cst = arith.constant dense<0.000000e+00> : vector<8x64xf32>
    %2 = tpu.matmul %0, %1, %cst {dimension_numbers = #tpu.dot_dimension_numbers<[1], [0], [0], [1], [0, 0, 1, 1], [], []>} : vector<8x8xf32>, vector<8x64xf32>, vector<8x64xf32> -> vector<8x64xf32>
    %c0_3 = arith.constant 0 : index
    %c0_4 = arith.constant 0 : index
    %3 = vector.load %arg3[%c0_3, %c0_4] : memref<1x64xf32, #tpu.memory_space<vmem>>, vector<1x64xf32>
    %4 = vector.broadcast %3 : vector<1x64xf32> to vector<8x64xf32>
    %5 = arith.addf %2, %4 : vector<8x64xf32>
    %cst_5 = arith.constant 0.000000e+00 : f32
    %6 = vector.broadcast %cst_5 : f32 to vector<8x64xf32>
    %7 = arith.maximumf %5, %6 : vector<8x64xf32>
    %c0_6 = arith.constant 0 : index
    %c0_7 = arith.constant 0 : index
    %8 = vector.load %arg4[%c0_6, %c0_7] : memref<64x64xf32, #tpu.memory_space<vmem>>, vector<64x64xf32>
    %cst_8 = arith.constant dense<0.000000e+00> : vector<64x8xf32>
    %9 = tpu.matmul %8, %7, %cst_8 {dimension_numbers = #tpu.dot_dimension_numbers<[1], [1], [0], [0], [0, 0, 1, 0], [], []>} : vector<64x64xf32>, vector<8x64xf32>, vector<64x8xf32> -> vector<64x8xf32>
    %c0_9 = arith.constant 0 : index
    %c0_10 = arith.constant 0 : index
    %10 = vector.load %arg5[%c0_9, %c0_10] : memref<64x1xf32, #tpu.memory_space<vmem>>, vector<64x1xf32>
    %11 = vector.broadcast %10 : vector<64x1xf32> to vector<64x8xf32>
    %12 = arith.addf %9, %11 : vector<64x8xf32>
    %cst_11 = arith.constant 0.000000e+00 : f32
    %13 = vector.broadcast %cst_11 : f32 to vector<64x8xf32>
    %14 = arith.maximumf %12, %13 : vector<64x8xf32>
    %c0_12 = arith.constant 0 : index
    %c0_13 = arith.constant 0 : index
    %15 = vector.load %arg6[%c0_12, %c0_13] : memref<4x64xf32, #tpu.memory_space<vmem>>, vector<4x64xf32>
    %cst_14 = arith.constant dense<0.000000e+00> : vector<4x8xf32>
    %16 = tpu.matmul %15, %14, %cst_14 {dimension_numbers = #tpu.dot_dimension_numbers<[1], [0], [0], [1], [0, 0, 1, 1], [], []>} : vector<4x64xf32>, vector<64x8xf32>, vector<4x8xf32> -> vector<4x8xf32>
    %c0_15 = arith.constant 0 : index
    %c0_16 = arith.constant 0 : index
    %17 = vector.load %arg7[%c0_15, %c0_16] : memref<4x1xf32, #tpu.memory_space<vmem>>, vector<4x1xf32>
    %18 = vector.broadcast %17 : vector<4x1xf32> to vector<4x8xf32>
    %19 = arith.addf %16, %18 : vector<4x8xf32>
    %c0_17 = arith.constant 0 : index
    %c0_18 = arith.constant 0 : index
    %20 = vector.load %arg8[%c0_17, %c0_18] : memref<4x8xf32, #tpu.memory_space<vmem>>, vector<4x8xf32>
    tpu.vector_store %arg8[%c0_17, %c0_18], %19 {strides = array<i32>} : memref<4x8xf32, #tpu.memory_space<vmem>>, vector<4x8xf32>,
    return
  }
  func.func @transform_0(%arg0: i32) -> (i32, i32) {
    %c0_i32 = arith.constant 0 : i32
    %c0_i32_0 = arith.constant 0 : i32
    return %arg0, %c0_i32 : i32, i32
  }
  func.func @transform_1(%arg0: i32) -> (i32, i32) {
    %c0_i32 = arith.constant 0 : i32
    %c0_i32_0 = arith.constant 0 : i32
    %c0_i32_1 = arith.constant 0 : i32
    return %c0_i32, %c0_i32_0 : i32, i32
  }
  func.func @transform_2(%arg0: i32) -> (i32, i32) {
    %c0_i32 = arith.constant 0 : i32
    %c0_i32_0 = arith.constant 0 : i32
    %c0_i32_1 = arith.constant 0 : i32
    return %c0_i32, %c0_i32_0 : i32, i32
  }
  func.func @transform_3(%arg0: i32) -> (i32, i32) {
    %c0_i32 = arith.constant 0 : i32
    %c0_i32_0 = arith.constant 0 : i32
    %c0_i32_1 = arith.constant 0 : i32
    return %c0_i32, %c0_i32_0 : i32, i32
  }
  func.func @transform_4(%arg0: i32) -> (i32, i32) {
    %c0_i32 = arith.constant 0 : i32
    %c0_i32_0 = arith.constant 0 : i32
    %c0_i32_1 = arith.constant 0 : i32
    return %c0_i32, %c0_i32_0 : i32, i32
  }
  func.func @transform_5(%arg0: i32) -> (i32, i32) {
    %c0_i32 = arith.constant 0 : i32
    %c0_i32_0 = arith.constant 0 : i32
    %c0_i32_1 = arith.constant 0 : i32
    return %c0_i32, %c0_i32_0 : i32, i32
  }
  func.func @transform_6(%arg0: i32) -> (i32, i32) {
    %c0_i32 = arith.constant 0 : i32
    %c0_i32_0 = arith.constant 0 : i32
    %c0_i32_1 = arith.constant 0 : i32
    return %c0_i32, %c0_i32_0 : i32, i32
  }
  func.func @transform_7(%arg0: i32) -> (i32, i32) {
    %c0_i32 = arith.constant 0 : i32
    %c0_i32_0 = arith.constant 0 : i32
    return %c0_i32, %arg0 : i32, i32
  }
}

</mosaic_0001>

<llo_original>
// kernel: ptqnet_forward_feature_major.1
$region0: #{ptqnet_forward_feature_major.1}
  #allocation0 [shape = 'u32[]', space=smem, size = 0x4, offset = 0x4, fixed_abs, tag = 'smem constant byte address 0x4 - core index']
  #allocation1 [shape = 'u32[144,128]{1,0:T(1,128)}', space=vmem, size = 0x12000, scoped, tag = 'internal scratch']
  %s0 = inlined_call_operand.vmem [shape: f32[8,8], index: 0, kind: input, shape index: {}]
  %s1 = inlined_call_operand.vmem [shape: f32[8,64], index: 1, kind: input, shape index: {}]
  %s2 = inlined_call_operand.vmem [shape: f32[1,64], index: 2, kind: input, shape index: {}]
  %s3 = inlined_call_operand.vmem [shape: f32[64,64], index: 3, kind: input, shape index: {}]
  %s4 = inlined_call_operand.vmem [shape: f32[64,1], index: 4, kind: input, shape index: {}]
  %s5 = inlined_call_operand.vmem [shape: f32[4,64], index: 5, kind: input, shape index: {}]
  %s6 = inlined_call_operand.vmem [shape: f32[4,1], index: 6, kind: input, shape index: {}]
  %s7 = inlined_call_operand.hbm [shape: f32[4,8], index: 7, kind: output, shape index: {}]
  %s8 = sld [smem:[#allocation0]]
  $region38: #{ptqnet_forward_feature_major.1} parent=0
    _
  %s10 = ssub.s32 1, %s8
  %s11 = scalar_select 0, %s10, %s8
  $region1: #{ptqnet_forward_feature_major.1} parent=0
    #allocation2 [shape = 'u8[2048]{0}', space=vmem, size = 0x800, scoped, tag = 'output window, operand 0, single buffered']
    #allocation3 [shape = 's32[1]{0}', space=sflag, size = 0x4, scoped, tag = 'scoped memory for ptqnet_forward_feature_major.1']
    %12 = vsyncpa [#allocation3], 0
    // Predicated region
    $region2: #{ptqnet_forward_feature_major.1} parent=1 // pred_check
      _
    $region3: #{ptqnet_forward_feature_major.1} parent=1 // pred_check_branch
      %14 = sbr.rel (0) target = $region5
    $region4: #{ptqnet_forward_feature_major.1} parent=1 // pred_region
      _
    $region5: #{ptqnet_forward_feature_major.1} parent=1 // pred_fallthru
      _
    // Predicated region
    $region6: #{ptqnet_forward_feature_major.1} parent=1 // pred_check
      _
    $region7: #{ptqnet_forward_feature_major.1} parent=1 // pred_check_branch
      %16 = sbr.rel (0) target = $region9
    $region8: #{ptqnet_forward_feature_major.1} parent=1 // pred_region
      _
    $region9: #{ptqnet_forward_feature_major.1} parent=1 // pred_fallthru
      _
    // Predicated region
    $region10: #{ptqnet_forward_feature_major.1} parent=1 // pred_check
      _
    $region11: #{ptqnet_forward_feature_major.1} parent=1 // pred_check_branch
      %18 = sbr.rel (0) target = $region13
    $region12: #{ptqnet_forward_feature_major.1} parent=1 // pred_region
      _
    $region13: #{ptqnet_forward_feature_major.1} parent=1 // pred_fallthru
      _
    // Predicated region
    $region14: #{ptqnet_forward_feature_major.1} parent=1 // pred_check
      _
    $region15: #{ptqnet_forward_feature_major.1} parent=1 // pred_check_branch
      %20 = sbr.rel (0) target = $region17
    $region16: #{ptqnet_forward_feature_major.1} parent=1 // pred_region
      _
    $region17: #{ptqnet_forward_feature_major.1} parent=1 // pred_fallthru
      _
    // Predicated region
    $region18: #{ptqnet_forward_feature_major.1} parent=1 // pred_check
      _
    $region19: #{ptqnet_forward_feature_major.1} parent=1 // pred_check_branch
      %22 = sbr.rel (0) target = $region21
    $region20: #{ptqnet_forward_feature_major.1} parent=1 // pred_region
      _
    $region21: #{ptqnet_forward_feature_major.1} parent=1 // pred_fallthru
      _
    // Predicated region
    $region22: #{ptqnet_forward_feature_major.1} parent=1 // pred_check
      _
    $region23: #{ptqnet_forward_feature_major.1} parent=1 // pred_check_branch
      %24 = sbr.rel (0) target = $region25
    $region24: #{ptqnet_forward_feature_major.1} parent=1 // pred_region
      _
    $region25: #{ptqnet_forward_feature_major.1} parent=1 // pred_fallthru
      _
    // Predicated region
    $region26: #{ptqnet_forward_feature_major.1} parent=1 // pred_check
      _
    $region27: #{ptqnet_forward_feature_major.1} parent=1 // pred_check_branch
      %26 = sbr.rel (0) target = $region29
    $region28: #{ptqnet_forward_feature_major.1} parent=1 // pred_region
      _
    $region29: #{ptqnet_forward_feature_major.1} parent=1 // pred_fallthru
      _
    %v27 = vld [vmem:[%s0] sm:$0xff]
    %v28 = vld [vmem:[%s1] sm:$0xff]
    %v29 = vld [vmem:[%s2] sm:$0x1]
    %v31 = vlaneseq
    %v32 = vshrl.u32 %v31, 7
    %v33 = vsub.s32 0, %v32
    %v34 = vrot.slane %v29, %v33
    %vm36 = vcmask 64512
    %v38 = vsel %vm36, %v27, 0
    %40 = vmatprep.subr.mxu0 0.0
    %41 = vmatpush1.msra.mxu0 %v28
    %42 = vmatprep.subr.mxu0 0.0
    %43 = vmatpush1.msra.mxu0 0.0
    %44 = vmatprep.subr.mxu0 0.0
    %45 = vmatpush1.msra.mxu0 0.0
    %46 = vmatprep.subr.mxu0 0.0
    %47 = vmatpush1.msra.mxu0 0.0
    %48 = vmatprep.subr.mxu0 0.0
    %49 = vmatpush1.msra.mxu0 0.0
    %50 = vmatprep.subr.mxu0 0.0
    %51 = vmatpush1.msra.mxu0 0.0
    %52 = vmatprep.subr.mxu0 0.0
    %53 = vmatpush1.msra.mxu0 0.0
    %54 = vmatprep.subr.mxu0 0.0
    %55 = vmatpush1.msra.mxu0 0.0
    %56 = vmatprep.subr.mxu0 0.0
    %57 = vmatpush1.msra.mxu0 0.0
    %58 = vmatprep.subr.mxu0 0.0
    %59 = vmatpush1.msra.mxu0 0.0
    %60 = vmatprep.subr.mxu0 0.0
    %61 = vmatpush1.msra.mxu0 0.0
    %62 = vmatprep.subr.mxu0 0.0
    %63 = vmatpush1.msra.mxu0 0.0
    %64 = vmatprep.subr.mxu0 0.0
    %65 = vmatpush1.msra.mxu0 0.0
    %66 = vmatprep.subr.mxu0 0.0
    %67 = vmatpush1.msra.mxu0 0.0
    %68 = vmatprep.subr.mxu0 0.0
    %69 = vmatpush1.msra.mxu0 0.0
    %70 = vmatprep.subr.mxu0 0.0
    %71 = vmatpush1.msra.mxu0 0.0
    %72 = vmatprep.subr.mxu0 0.0
    %73 = vmatpush1.msra.mxu0 0.0
    %74 = vmatprep.subr.mxu0 0.0
    %75 = vmatpush1.msra.mxu0 0.0
    %76 = vmatprep.subr.mxu0 0.0
    %77 = vmatpush1.msra.mxu0 0.0
    %78 = vmatprep.subr.mxu0 0.0
    %79 = vmatpush1.msra.mxu0 0.0
    %80 = vmatprep.subr.mxu0 0.0
    %81 = vmatpush1.msra.mxu0 0.0
    %82 = vmatprep.subr.mxu0 0.0
    %83 = vmatpush1.msra.mxu0 0.0
    %84 = vmatprep.subr.mxu0 0.0
    %85 = vmatpush1.msra.mxu0 0.0
    %86 = vmatprep.subr.mxu0 0.0
    %87 = vmatpush1.msra.mxu0 0.0
    %88 = vmatprep.subr.mxu0 0.0
    %89 = vmatpush1.msra.mxu0 0.0
    %90 = vmatprep.subr.mxu0 0.0
    %91 = vmatpush1.msra.mxu0 0.0
    %92 = vmatprep.subr.mxu0 0.0
    %93 = vmatpush1.msra.mxu0 0.0
    %94 = vmatprep.subr.mxu0 0.0
    %95 = vmatpush1.msra.mxu0 0.0
    %96 = vmatprep.subr.mxu0 0.0
    %97 = vmatpush1.msra.mxu0 0.0
    %98 = vmatprep.subr.mxu0 0.0
    %99 = vmatpush1.msra.mxu0 0.0
    %100 = vmatprep.subr.mxu0 0.0
    %101 = vmatpush1.msra.mxu0 0.0
    %102 = vmatprep.subr.mxu0 0.0
    %103 = vmatpush1.msra.mxu0 0.0
    %104 = vmatprep.mubr.f32.mxu0 0.0
    %105 = vmatmul.mubr.f32.gmra.mrb[0].mxu0 %v38
    %v106 = vpop.f32.mrb[0].mxu0
    %v107 = vadd.f32 %v34, %v106
    %v108 = vpop.f32.mrb[0].mxu0
    %109 = vdwg.mxu0
    %v110 = vmax.f32 %v107, 0.0
    %v111 = vld [vmem:[%s3] sm:$0xff]
    %v112 = vld [vmem:[%s3 + $0x8] sm:$0xff]
    %v113 = vld [vmem:[%s3 + $0x10] sm:$0xff]
    %v114 = vld [vmem:[%s3 + $0x18] sm:$0xff]
    %v115 = vld [vmem:[%s3 + $0x20] sm:$0xff]
    %v116 = vld [vmem:[%s3 + $0x28] sm:$0xff]
    %v117 = vld [vmem:[%s3 + $0x30] sm:$0xff]
    %v118 = vld [vmem:[%s3 + $0x38] sm:$0xff]
    %v119 = vld [vmem:[%s4] sm:$0xff]
    %v120 = vld [vmem:[%s4 + $0x8] sm:$0xff]
    %v121 = vld [vmem:[%s4 + $0x10] sm:$0xff]
    %v122 = vld [vmem:[%s4 + $0x18] sm:$0xff]
    %v123 = vld [vmem:[%s4 + $0x20] sm:$0xff]
    %v124 = vld [vmem:[%s4 + $0x28] sm:$0xff]
    %v125 = vld [vmem:[%s4 + $0x30] sm:$0xff]
    %v126 = vld [vmem:[%s4 + $0x38] sm:$0xff]
    %128 = vset.pattern.permute.xlu0 0
    %129 = vperm.xlu0 %128, %v119
    %v130 = vpop.permute.xlu0 %129
    %133 = vset.pattern.permute.xlu0 0
    %134 = vperm.xlu0 %133, %v120
    %v135 = vpop.permute.xlu0 %134
    %138 = vset.pattern.permute.xlu0 0
    %139 = vperm.xlu0 %138, %v121
    %v140 = vpop.permute.xlu0 %139
    %143 = vset.pattern.permute.xlu0 0
    %144 = vperm.xlu0 %143, %v122
    %v145 = vpop.permute.xlu0 %144
    %148 = vset.pattern.permute.xlu0 0
    %149 = vperm.xlu0 %148, %v123
    %v150 = vpop.permute.xlu0 %149
    %153 = vset.pattern.permute.xlu0 0
    %154 = vperm.xlu0 %153, %v124
    %v155 = vpop.permute.xlu0 %154
    %158 = vset.pattern.permute.xlu0 0
    %159 = vperm.xlu0 %158, %v125
    %v160 = vpop.permute.xlu0 %159
    %163 = vset.pattern.permute.xlu0 0
    %164 = vperm.xlu0 %163, %v126
    %v165 = vpop.permute.xlu0 %164
    %vm167 = vcmask 523264
    %v169 = vsel %vm167, %v111, 0
    %v172 = vsel %vm167, %v112, 0
    %v175 = vsel %vm167, %v113, 0
    %v178 = vsel %vm167, %v114, 0
    %v181 = vsel %vm167, %v115, 0
    %v184 = vsel %vm167, %v116, 0
    %v187 = vsel %vm167, %v117, 0
    %v190 = vsel %vm167, %v118, 0
    %v193 = vsel %vm167, %v110, 0
    %195 = vmatprep.subr.mxu0 0.0
    %196 = vmatpush1.xpose.msra.mxu0 %v193
    %197 = vmatprep.subr.mxu0 0.0
    %198 = vmatpush1.xpose.msra.mxu0 0.0
    %199 = vmatprep.subr.mxu0 0.0
    %200 = vmatpush1.xpose.msra.mxu0 0.0
    %201 = vmatprep.subr.mxu0 0.0
    %202 = vmatpush1.xpose.msra.mxu0 0.0
    %203 = vmatprep.subr.mxu0 0.0
    %204 = vmatpush1.xpose.msra.mxu0 0.0
    %205 = vmatprep.subr.mxu0 0.0
    %206 = vmatpush1.xpose.msra.mxu0 0.0
    %207 = vmatprep.subr.mxu0 0.0
    %208 = vmatpush1.xpose.msra.mxu0 0.0
    %209 = vmatprep.subr.mxu0 0.0
    %210 = vmatpush1.xpose.msra.mxu0 0.0
    %211 = vmatprep.subr.mxu0 0.0
    %212 = vmatpush1.xpose.msra.mxu0 0.0
    %213 = vmatprep.subr.mxu0 0.0
    %214 = vmatpush1.xpose.msra.mxu0 0.0
    %215 = vmatprep.subr.mxu0 0.0
    %216 = vmatpush1.xpose.msra.mxu0 0.0
    %217 = vmatprep.subr.mxu0 0.0
    %218 = vmatpush1.xpose.msra.mxu0 0.0
    %219 = vmatprep.subr.mxu0 0.0
    %220 = vmatpush1.xpose.msra.mxu0 0.0
    %221 = vmatprep.subr.mxu0 0.0
    %222 = vmatpush1.xpose.msra.mxu0 0.0
    %223 = vmatprep.subr.mxu0 0.0
    %224 = vmatpush1.xpose.msra.mxu0 0.0
    %225 = vmatprep.subr.mxu0 0.0
    %226 = vmatpush1.xpose.msra.mxu0 0.0
    %227 = vmatprep.subr.mxu0 0.0
    %228 = vmatpush1.xpose.msra.mxu0 0.0
    %229 = vmatprep.subr.mxu0 0.0
    %230 = vmatpush1.xpose.msra.mxu0 0.0
    %231 = vmatprep.subr.mxu0 0.0
    %232 = vmatpush1.xpose.msra.mxu0 0.0
    %233 = vmatprep.subr.mxu0 0.0
    %234 = vmatpush1.xpose.msra.mxu0 0.0
    %235 = vmatprep.subr.mxu0 0.0
    %236 = vmatpush1.xpose.msra.mxu0 0.0
    %237 = vmatprep.subr.mxu0 0.0
    %238 = vmatpush1.xpose.msra.mxu0 0.0
    %239 = vmatprep.subr.mxu0 0.0
    %240 = vmatpush1.xpose.msra.mxu0 0.0
    %241 = vmatprep.subr.mxu0 0.0
    %242 = vmatpush1.xpose.msra.mxu0 0.0
    %243 = vmatprep.subr.mxu0 0.0
    %244 = vmatpush1.xpose.msra.mxu0 0.0
    %245 = vmatprep.subr.mxu0 0.0
    %246 = vmatpush1.xpose.msra.mxu0 0.0
    %247 = vmatprep.subr.mxu0 0.0
    %248 = vmatpush1.xpose.msra.mxu0 0.0
    %249 = vmatprep.subr.mxu0 0.0
    %250 = vmatpush1.xpose.msra.mxu0 0.0
    %251 = vmatprep.subr.mxu0 0.0
    %252 = vmatpush1.xpose.msra.mxu0 0.0
    %253 = vmatprep.subr.mxu0 0.0
    %254 = vmatpush1.xpose.msra.mxu0 0.0
    %255 = vmatprep.subr.mxu0 0.0
    %256 = vmatpush1.xpose.msra.mxu0 0.0
    %257 = vmatprep.subr.mxu0 0.0
    %258 = vmatpush1.xpose.msra.mxu0 0.0
    %259 = vmatprep.mubr.f32.mxu0 0.0
    %260 = vmatmul.mubr.f32.gmra.mrb[0].mxu0 %v169
    %v261 = vpop.f32.mrb[0].mxu0
    %v262 = vadd.f32 %v130, %v261
    %v263 = vpop.f32.mrb[0].mxu0
    %264 = vmatprep.mubr.f32.mxu0 0.0
    %265 = vmatmul.mubr.f32.gmra.mrb[0].mxu0 %v172
    %v266 = vpop.f32.mrb[0].mxu0
    %v267 = vadd.f32 %v135, %v266
    %v268 = vpop.f32.mrb[0].mxu0
    %269 = vmatprep.mubr.f32.mxu0 0.0
    %270 = vmatmul.mubr.f32.gmra.mrb[0].mxu0 %v175
    %v271 = vpop.f32.mrb[0].mxu0
    %v272 = vadd.f32 %v140, %v271
    %v273 = vpop.f32.mrb[0].mxu0
    %274 = vmatprep.mubr.f32.mxu0 0.0
    %275 = vmatmul.mubr.f32.gmra.mrb[0].mxu0 %v178
    %v276 = vpop.f32.mrb[0].mxu0
    %v277 = vadd.f32 %v145, %v276
    %v278 = vpop.f32.mrb[0].mxu0
    %279 = vmatprep.mubr.f32.mxu0 0.0
    %280 = vmatmul.mubr.f32.gmra.mrb[0].mxu0 %v181
    %v281 = vpop.f32.mrb[0].mxu0
    %v282 = vadd.f32 %v150, %v281
    %v283 = vpop.f32.mrb[0].mxu0
    %284 = vmatprep.mubr.f32.mxu0 0.0
    %285 = vmatmul.mubr.f32.gmra.mrb[0].mxu0 %v184
    %v286 = vpop.f32.mrb[0].mxu0
    %v287 = vadd.f32 %v155, %v286
    %v288 = vpop.f32.mrb[0].mxu0
    %289 = vmatprep.mubr.f32.mxu0 0.0
    %290 = vmatmul.mubr.f32.gmra.mrb[0].mxu0 %v187
    %v291 = vpop.f32.mrb[0].mxu0
    %v292 = vadd.f32 %v160, %v291
    %v293 = vpop.f32.mrb[0].mxu0
    %294 = vmatprep.mubr.f32.mxu0 0.0
    %295 = vmatmul.mubr.f32.gmra.mrb[0].mxu0 %v190
    %v296 = vpop.f32.mrb[0].mxu0
    %v297 = vadd.f32 %v165, %v296
    %v298 = vpop.f32.mrb[0].mxu0
    %299 = vdwg.mxu0
    %v300 = vmax.f32 %v262, 0.0
    %v301 = vmax.f32 %v267, 0.0
    %v302 = vmax.f32 %v272, 0.0
    %v303 = vmax.f32 %v277, 0.0
    %v304 = vmax.f32 %v282, 0.0
    %v305 = vmax.f32 %v287, 0.0
    %v306 = vmax.f32 %v292, 0.0
    %v307 = vmax.f32 %v297, 0.0
    %v308 = vld [vmem:[%s5] sm:$0xf]
    %v309 = vld [vmem:[%s6] sm:$0xf]
    %311 = vset.pattern.permute.xlu0 0
    %312 = vperm.xlu0 %311, %v309
    %v313 = vpop.permute.xlu0 %312
    %v316 = vsel %vm167, %v308, 0
    %318 = vmatprep.subr.mxu0 0.0
    %319 = vmatpush1.msra.mxu0 %v300
    %320 = vmatprep.subr.mxu0 0.0
    %321 = vmatpush1.msra.mxu0 %v301
    %322 = vmatprep.subr.mxu0 0.0
    %323 = vmatpush1.msra.mxu0 %v302
    %324 = vmatprep.subr.mxu0 0.0
    %325 = vmatpush1.msra.mxu0 %v303
    %326 = vmatprep.subr.mxu0 0.0
    %327 = vmatpush1.msra.mxu0 %v304
    %328 = vmatprep.subr.mxu0 0.0
    %329 = vmatpush1.msra.mxu0 %v305
    %330 = vmatprep.subr.mxu0 0.0
    %331 = vmatpush1.msra.mxu0 %v306
    %332 = vmatprep.subr.mxu0 0.0
    %333 = vmatpush1.msra.mxu0 %v307
    %334 = vmatprep.subr.mxu0 0.0
    %335 = vmatpush1.msra.mxu0 0.0
    %336 = vmatprep.subr.mxu0 0.0
    %337 = vmatpush1.msra.mxu0 0.0
    %338 = vmatprep.subr.mxu0 0.0
    %339 = vmatpush1.msra.mxu0 0.0
    %340 = vmatprep.subr.mxu0 0.0
    %341 = vmatpush1.msra.mxu0 0.0
    %342 = vmatprep.subr.mxu0 0.0
    %343 = vmatpush1.msra.mxu0 0.0
    %344 = vmatprep.subr.mxu0 0.0
    %345 = vmatpush1.msra.mxu0 0.0
    %346 = vmatprep.subr.mxu0 0.0
    %347 = vmatpush1.msra.mxu0 0.0
    %348 = vmatprep.subr.mxu0 0.0
    %349 = vmatpush1.msra.mxu0 0.0
    %350 = vmatprep.subr.mxu0 0.0
    %351 = vmatpush1.msra.mxu0 0.0
    %352 = vmatprep.subr.mxu0 0.0
    %353 = vmatpush1.msra.mxu0 0.0
    %354 = vmatprep.subr.mxu0 0.0
    %355 = vmatpush1.msra.mxu0 0.0
    %356 = vmatprep.subr.mxu0 0.0
    %357 = vmatpush1.msra.mxu0 0.0
    %358 = vmatprep.subr.mxu0 0.0
    %359 = vmatpush1.msra.mxu0 0.0
    %360 = vmatprep.subr.mxu0 0.0
    %361 = vmatpush1.msra.mxu0 0.0
    %362 = vmatprep.subr.mxu0 0.0
    %363 = vmatpush1.msra.mxu0 0.0
    %364 = vmatprep.subr.mxu0 0.0
    %365 = vmatpush1.msra.mxu0 0.0
    %366 = vmatprep.subr.mxu0 0.0
    %367 = vmatpush1.msra.mxu0 0.0
    %368 = vmatprep.subr.mxu0 0.0
    %369 = vmatpush1.msra.mxu0 0.0
    %370 = vmatprep.subr.mxu0 0.0
    %371 = vmatpush1.msra.mxu0 0.0
    %372 = vmatprep.subr.mxu0 0.0
    %373 = vmatpush1.msra.mxu0 0.0
    %374 = vmatprep.subr.mxu0 0.0
    %375 = vmatpush1.msra.mxu0 0.0
    %376 = vmatprep.subr.mxu0 0.0
    %377 = vmatpush1.msra.mxu0 0.0
    %378 = vmatprep.subr.mxu0 0.0
    %379 = vmatpush1.msra.mxu0 0.0
    %380 = vmatprep.subr.mxu0 0.0
    %381 = vmatpush1.msra.mxu0 0.0
    %382 = vmatprep.mubr.f32.mxu0 0.0
    %383 = vmatmul.mubr.f32.gmra.mrb[0].mxu0 %v316
    %v384 = vpop.f32.mrb[0].mxu0
    %v385 = vadd.f32 %v313, %v384
    %v386 = vpop.f32.mrb[0].mxu0
    %387 = vdwg.mxu0
    %vm388 = vcmask 60416
    %389 = vst.msk [vmem:[#allocation2] sm:$0xf] %vm388, %v385
    // Predicated region
    $region30: #{ptqnet_forward_feature_major.1} parent=1 // pred_check
      _
    $region31: #{ptqnet_forward_feature_major.1} parent=1 // pred_check_branch
      %391 = sbr.rel (0) target = $region33
    $region32: #{ptqnet_forward_feature_major.1} parent=1 // pred_region
      %s393 = ssub.s32 64, 64
      %394 = vsyncadd [#allocation3], %s393
      %s396 = sshll.u32 [#allocation2], 4
      %s397 = int_to_ptr.vmem [resolvable:$true] %s396
      %399 = dma.vmem_to_hbm [thread:$0]  %s397, 64, %s7, [#allocation3]
    $region33: #{ptqnet_forward_feature_major.1} parent=1 // pred_fallthru
      _
    // Predicated region
    $region34: #{ptqnet_forward_feature_major.1} parent=1 // pred_check
      _
    $region35: #{ptqnet_forward_feature_major.1} parent=1 // pred_check_branch
      %401 = sbr.rel (0) target = $region37
    $region36: #{ptqnet_forward_feature_major.1} parent=1 // pred_region
      %402 = dma.done [#allocation3], 64
    $region37: #{ptqnet_forward_feature_major.1} parent=1 // pred_fallthru
      _
    %403 = vsyncpa [#allocation3], 1

</llo_original>
